<compile_context>
chip_gen: v7x
topology: tpu7x:2x2x1
jax: 0.10.0
libtpu: 0.0.40
codegen_flags: <defaults>
</compile_context>

<pallas_src>
import functools

import jax
import jax.numpy as jnp
from jax import lax
from jax.experimental import pallas as pl
from jax.experimental.pallas import tpu as pltpu

EXAM_WEIGHTS = (0.0736196319, 0.2346625767, 0.0782208589, 0.06257668712,
                0.1042944785, 0.06257668712, 0.1042944785, 0.1877300613,
                0.09202453988)
IMAGE_WEIGHT = 0.07361963
_SUM_EXAM_W = float(sum(EXAM_WEIGHTS))

# Flattened (row*3 + col) weight layout of e_pred[1..8] inside the (4,3) tile
#   rows: 0=PE_NEG_IND  1=RV_RV1_NEG  2=CH_CHAC_NEG_AC  3=RLC
#   (0,2)->w8  (1,0)->w1 (1,1)->w2  (2,0)->w4 (2,1)->w6  (3,0)->w5 (3,1)->w3 (3,2)->w7
_W_FLAT = (0.0, 0.0, EXAM_WEIGHTS[8],
           EXAM_WEIGHTS[1], EXAM_WEIGHTS[2], 0.0,
           EXAM_WEIGHTS[4], EXAM_WEIGHTS[6], 0.0,
           EXAM_WEIGHTS[5], EXAM_WEIGHTS[3], EXAM_WEIGHTS[7])
# Entries of e_pred[0]/e_true[0]: (0,1), (1,2), (2,2)  (flat ids 1, 5, 8)
_M0_FLAT_IDS = (1, 5, 8)


def _log1p(t):
    """Accurate log(1+t) using only log/div/select (Kahan's correction).

    Avoids relying on a dedicated log1p lowering in the Pallas TPU backend
    while matching log1p precision for small t.
    """
    u = 1.0 + t
    d = u - 1.0
    return jnp.where(d == 0.0, t, jnp.log(u) * (t / d))


# --------------------------------- kernel ------------------------------------

def _combo_loss_kernel(exam_ref, img_ref, out_ref, *, n_valid):
    f32 = jnp.float32

    # ------------------------- exam block: (2, 4, 3) -------------------------
    z = exam_ref[0]      # (4,3) logits
    y = exam_ref[1]      # (4,3) labels

    row = lax.broadcasted_iota(jnp.int32, z.shape, 0)
    col = lax.broadcasted_iota(jnp.int32, z.shape, 1)
    colf = col.astype(f32)
    flat = row * 3 + col

    # one batched row softmax / log-sum-exp for all four exam heads
    m = jnp.max(z, axis=-1, keepdims=True)
    e = jnp.exp(z - m)
    s = jnp.sum(e, axis=-1, keepdims=True)
    lse = m + jnp.log(s)
    softmax = e / s

    # rsna prob tile: softmax on rows 0..2, sigmoid on row 3 (RLC)
    sigm = 1.0 / (1.0 + jnp.exp(-z))
    probs = jnp.where(row < 3, softmax, sigm)

    # batched CrossEntropy for rows 0..2; target = first argmax of the label row
    # (tie-break to the first maximal index, matching torch.argmax)
    ymax = jnp.max(y, axis=-1, keepdims=True)
    cand = jnp.where(y >= ymax, colf, 3.0)
    tcol = jnp.min(cand, axis=-1, keepdims=True)
    onehot = (colf == tcol).astype(f32)
    picked = jnp.sum(z * onehot, axis=-1, keepdims=True)
    ce_rows = lse - picked                                           # (4,1)
    rrow = lax.broadcasted_iota(jnp.int32, ce_rows.shape, 0)
    ce_sum = jnp.sum(jnp.where(rrow < 3, ce_rows, 0.0))              # loss1+loss2+loss3

    # loss4: mean BCEWithLogits on the RLC row  (softplus(z) - z*y)
    sp_exam = jnp.maximum(z, 0.0) + _log1p(jnp.exp(-jnp.abs(z)))
    loss4 = jnp.sum(jnp.where(row == 3, sp_exam - z * y, 0.0)) / 3.0

    # vectorized RSNA exam loss:
    #   sum_k w_k * BCE(e_pred[k], e_true[k])
    #     = sum(W_TILE * BCE(probs, y))  +  w0 * BCE(mean3(M0*probs), mean3(M0*y))
    logp = jnp.maximum(jnp.log(probs), -100.0)        # torch BCELoss log clamp
    log1mp = jnp.maximum(jnp.log(1.0 - probs), -100.0)
    bce_tile = -(y * logp + (1.0 - y) * log1mp)

    w_tile = jnp.zeros_like(z)
    for idx, wv in enumerate(_W_FLAT):                # 8 non-zero positions, splat consts only
        if wv != 0.0:
            w_tile = jnp.where(flat == idx, wv, w_tile)
    exam_loss = jnp.sum(w_tile * bce_tile)

    m0 = ((flat == _M0_FLAT_IDS[0]) | (flat == _M0_FLAT_IDS[1])
          | (flat == _M0_FLAT_IDS[2])).astype(f32)
    p0 = jnp.sum(m0 * probs) / 3.0
    t0 = jnp.sum(m0 * y) / 3.0
    bce0 = -(t0 * jnp.maximum(jnp.log(p0), -100.0)
             + (1.0 - t0) * jnp.maximum(jnp.log(1.0 - p0), -100.0))
    exam_loss = exam_loss + EXAM_WEIGHTS[0] * bce0

    # ------------------------ image block: (2, R, 128) ------------------------
    zi = img_ref[0]                                   # (R,128) image logits
    yi = img_ref[1]                                   # (R,128) image labels
    r, c = zi.shape
    n_f = float(n_valid)
    if r * c == n_valid:
        mask = jnp.ones_like(zi)
    else:
        fidx = (lax.broadcasted_iota(jnp.int32, zi.shape, 0) * c
                + lax.broadcasted_iota(jnp.int32, zi.shape, 1))
        mask = (fidx < n_valid).astype(f32)

    # single exp pass: softplus(z) = max(z,0)+log1p(e^{-|z|}); softplus(-z) = softplus(z)-z
    sp = jnp.maximum(zi, 0.0) + _log1p(jnp.exp(-jnp.abs(zi)))
    spn = sp - zi

    # loss0 = mean BCEWithLogits over the N valid image slices
    loss0 = jnp.sum((sp - zi * yi) * mask) / n_f

    # rsna image term: BCELoss(sigmoid(z), y) computed in logit space.
    # Exactly equivalent to sigmoid+BCELoss for |z| below f32 sigmoid saturation
    # (~16.6); beyond that the -100 clamp semantics differ negligibly.
    bce_img = yi * jnp.minimum(spn, 100.0) + (1.0 - yi) * jnp.minimum(sp, 100.0)
    sum_y = jnp.sum(yi * mask)
    qi = sum_y / n_f
    image_loss = IMAGE_WEIGHT * qi * jnp.sum(bce_img * mask)

    # ------------------------------ combine -----------------------------------
    loss = (loss0 + ce_sum + loss4) / 5.0
    total_weights = _SUM_EXAM_W + IMAGE_WEIGHT * qi * n_f
    rsna = (exam_loss + image_loss) / total_weights

    out_ref[0] = loss0
    out_ref[1] = loss
    out_ref[2] = rsna


# -------------------------------- wrapper ------------------------------------

def _pallas_combo(exam, img, n_valid):
    kernel = functools.partial(_combo_loss_kernel, n_valid=n_valid)
    return pl.pallas_call(
        kernel,
        out_shape=jax.ShapeDtypeStruct((3,), jnp.float32),
        in_specs=[pl.BlockSpec(memory_space=pltpu.MemorySpace.VMEM),
                  pl.BlockSpec(memory_space=pltpu.MemorySpace.VMEM)],
        out_specs=pl.BlockSpec(memory_space=pltpu.MemorySpace.SMEM),
    )(exam, img)


@jax.jit
def combo_loss(predicted, batch_labels0, batch_labels1, lebal3):
    """predicted = (img_logits, pe_neg_ind(1,3), rv_rv1_neg(1,3),
                    ch_chac_neg_ac(1,3), rlc(1,3)).
    Returns a (3,) f32 array [loss0, loss, rsna]; unpack in the caller."""
    f32 = jnp.float32

    z_exam = jnp.stack([jnp.asarray(predicted[1], f32).reshape(3),
                        jnp.asarray(predicted[2], f32).reshape(3),
                        jnp.asarray(predicted[3], f32).reshape(3),
                        jnp.asarray(predicted[4], f32).reshape(3)])
    y_exam = jnp.stack([jnp.asarray(batch_labels1[0], f32).reshape(3),
                        jnp.asarray(batch_labels1[1], f32).reshape(3),
                        jnp.asarray(lebal3, f32).reshape(3),
                        jnp.asarray(batch_labels1[2], f32).reshape(3)])
    exam = jnp.stack([z_exam, y_exam])                        # (2, 4, 3)

    zi = jnp.asarray(predicted[0], f32).reshape(-1)
    yi = jnp.asarray(batch_labels0, f32).reshape(-1)
    n = zi.shape[0]
    n_pad = ((n + 127) // 128) * 128
    r = n_pad // 128
    zi = jnp.pad(zi, (0, n_pad - n)).reshape(r, 128)
    yi = jnp.pad(yi, (0, n_pad - n)).reshape(r, 128)
    img = jnp.stack([zi, yi])                                 # (2, R, 128)

    return _pallas_combo(exam, img, n)


# --------------------------------- main --------------------------------------

if __name__ == "__main__":
    key = jax.random.PRNGKey(0)
    k0, k1, k2, k3, k4, k5, k6, k7 = jax.random.split(key, 8)

    N = 16  # number of image slices in the exam

    # predictions (logits)
    pred_img = jax.random.normal(k0, (N,), jnp.float32)
    pred1 = jax.random.normal(k1, (1, 3), jnp.float32)   # PE_NEG_IND logits
    pred2 = jax.random.normal(k2, (1, 3), jnp.float32)   # RV_RV1_NEG logits
    pred3 = jax.random.normal(k3, (1, 3), jnp.float32)   # CH_CHAC_NEG_AC logits
    pred4 = jax.random.normal(k4, (1, 3), jnp.float32)   # RLC logits
    predicted = (pred_img, pred1, pred2, pred3, pred4)

    # labels
    batch_labels0 = jax.random.bernoulli(k5, 0.4, (N,)).astype(jnp.float32)
    row0 = jax.nn.one_hot(jax.random.randint(k6, (), 0, 3), 3, dtype=jnp.float32)
    row1 = jax.nn.one_hot(jax.random.randint(k7, (), 0, 3), 3, dtype=jnp.float32)
    row2 = jax.random.bernoulli(jax.random.fold_in(key, 42), 0.5, (3,)).astype(jnp.float32)
    batch_labels1 = jnp.stack([row0, row1, row2], axis=0)            # (3, 3)
    lebal3 = jax.nn.one_hot(jax.random.randint(jax.random.fold_in(key, 7), (), 0, 3),
                            3, dtype=jnp.float32)                     # (3,)

    out = combo_loss(predicted, batch_labels0, batch_labels1, lebal3)
    out = jax.block_until_ready(out)
    loss0, loss, rsna = float(out[0]), float(out[1]), float(out[2])  # unpack outside jit
    print("KERNEL_OK")
</pallas_src>

<mosaic_0001>
module attributes {stable_mosaic.version = 11 : i64} {
  func.func @_combo_loss_kernel(%arg0: memref<2x4x3xf32, #tpu.memory_space<vmem>>, %arg1: memref<2x1x128xf32, #tpu.memory_space<vmem>>, %arg2: memref<3xf32, #tpu.memory_space<smem>>) attributes {dimension_semantics = [], scalar_prefetch = 0 : i64, scratch_operands = 0 : i64, tpu.core_type = #tpu.core_type<tc>} {
    %c0 = arith.constant 0 : index
    %c0_0 = arith.constant 0 : index
    %c0_1 = arith.constant 0 : index
    %0 = vector.load %arg0[%c0, %c0_0, %c0_1] : memref<2x4x3xf32, #tpu.memory_space<vmem>>, vector<1x4x3xf32>
    %1 = vector.shape_cast %0 : vector<1x4x3xf32> to vector<4x3xf32>
    %c1 = arith.constant 1 : index
    %c0_2 = arith.constant 0 : index
    %c0_3 = arith.constant 0 : index
    %2 = vector.load %arg0[%c1, %c0_2, %c0_3] : memref<2x4x3xf32, #tpu.memory_space<vmem>>, vector<1x4x3xf32>
    %3 = vector.shape_cast %2 : vector<1x4x3xf32> to vector<4x3xf32>
    %4 = tpu.iota {dimensions = array<i32: 0>} : vector<4x3xi32>
    %5 = tpu.iota {dimensions = array<i32: 1>} : vector<4x3xi32>
    %6 = arith.sitofp %5 : vector<4x3xi32> to vector<4x3xf32>
    %c3_i32 = arith.constant 3 : i32
    %7 = vector.broadcast %c3_i32 : i32 to vector<4x3xi32>
    %8 = arith.muli %4, %7 : vector<4x3xi32>
    %9 = arith.addi %8, %5 : vector<4x3xi32>
    %cst = arith.constant dense<0xFF800000> : vector<4xf32>
    %10 = vector.multi_reduction <maximumf>, %1, %cst [1] : vector<4x3xf32> to vector<4xf32>
    %11 = vector.shape_cast %10 : vector<4xf32> to vector<4x1xf32>
    %12 = vector.broadcast %11 : vector<4x1xf32> to vector<4x3xf32>
    %13 = arith.subf %1, %12 : vector<4x3xf32>
    %14 = math.exp %13 : vector<4x3xf32>
    %cst_4 = arith.constant dense<0.000000e+00> : vector<4xf32>
    %15 = vector.multi_reduction <add>, %14, %cst_4 [1] : vector<4x3xf32> to vector<4xf32>
    %16 = vector.shape_cast %15 : vector<4xf32> to vector<4x1xf32>
    %17 = math.log %16 : vector<4x1xf32>
    %18 = arith.addf %11, %17 : vector<4x1xf32>
    %19 = vector.broadcast %16 : vector<4x1xf32> to vector<4x3xf32>
    %20 = arith.divf %14, %19 : vector<4x3xf32>
    %cst_5 = arith.constant 0.000000e+00 : f32
    %21 = vector.broadcast %cst_5 : f32 to vector<4x3xf32>
    %22 = arith.subf %21, %1 : vector<4x3xf32>
    %23 = math.exp %22 : vector<4x3xf32>
    %cst_6 = arith.constant 1.000000e+00 : f32
    %24 = vector.broadcast %cst_6 : f32 to vector<4x3xf32>
    %25 = arith.addf %24, %23 : vector<4x3xf32>
    %cst_7 = arith.constant 1.000000e+00 : f32
    %26 = vector.broadcast %cst_7 : f32 to vector<4x3xf32>
    %27 = arith.divf %26, %25 : vector<4x3xf32>
    %c3_i32_8 = arith.constant 3 : i32
    %28 = vector.broadcast %c3_i32_8 : i32 to vector<4x3xi32>
    %29 = arith.cmpi slt, %4, %28 : vector<4x3xi32>
    %30 = arith.select %29, %20, %27 : vector<4x3xi1>, vector<4x3xf32>
    %cst_9 = arith.constant dense<0xFF800000> : vector<4xf32>
    %31 = vector.multi_reduction <maximumf>, %3, %cst_9 [1] : vector<4x3xf32> to vector<4xf32>
    %32 = vector.shape_cast %31 : vector<4xf32> to vector<4x1xf32>
    %33 = vector.broadcast %32 : vector<4x1xf32> to vector<4x3xf32>
    %34 = arith.cmpf oge, %3, %33 : vector<4x3xf32>
    %cst_10 = arith.constant 3.000000e+00 : f32
    %35 = vector.broadcast %cst_10 : f32 to vector<4x3xf32>
    %36 = arith.select %34, %6, %35 : vector<4x3xi1>, vector<4x3xf32>
    %cst_11 = arith.constant dense<0x7F800000> : vector<4xf32>
    %37 = vector.multi_reduction <minimumf>, %36, %cst_11 [1] : vector<4x3xf32> to vector<4xf32>
    %38 = vector.shape_cast %37 : vector<4xf32> to vector<4x1xf32>
    %39 = vector.broadcast %38 : vector<4x1xf32> to vector<4x3xf32>
    %40 = arith.cmpf oeq, %6, %39 : vector<4x3xf32>
    %41 = arith.extui %40 : vector<4x3xi1> to vector<4x3xi32>
    %42 = arith.sitofp %41 : vector<4x3xi32> to vector<4x3xf32>
    %43 = arith.mulf %1, %42 : vector<4x3xf32>
    %cst_12 = arith.constant dense<0.000000e+00> : vector<4xf32>
    %44 = vector.multi_reduction <add>, %43, %cst_12 [1] : vector<4x3xf32> to vector<4xf32>
    %45 = vector.shape_cast %44 : vector<4xf32> to vector<4x1xf32>
    %46 = arith.subf %18, %45 : vector<4x1xf32>
    %47 = tpu.iota {dimensions = array<i32: 0>} : vector<4x1xi32>
    %c3_i32_13 = arith.constant 3 : i32
    %48 = vector.broadcast %c3_i32_13 : i32 to vector<4x1xi32>
    %49 = arith.cmpi slt, %47, %48 : vector<4x1xi32>
    %cst_14 = arith.constant 0.000000e+00 : f32
    %50 = vector.broadcast %cst_14 : f32 to vector<4x1xf32>
    %51 = arith.select %49, %46, %50 : vector<4x1xi1>, vector<4x1xf32>
    %52 = vector.shape_cast %51 : vector<4x1xf32> to vector<1x4x1xf32>
    %cst_15 = arith.constant dense<0.000000e+00> : vector<1xf32>
    %53 = vector.multi_reduction <add>, %52, %cst_15 [1, 2] : vector<1x4x1xf32> to vector<1xf32>
    %54 = vector.shape_cast %53 : vector<1xf32> to vector<1x1x1xf32>
    %55 = vector.extract %54[0, 0, 0] : f32 from vector<1x1x1xf32>
    %cst_16 = arith.constant 0.000000e+00 : f32
    %56 = vector.broadcast %cst_16 : f32 to vector<4x3xf32>
    %57 = arith.maximumf %1, %56 : vector<4x3xf32>
    %58 = math.absf %1 : vector<4x3xf32>
    %cst_17 = arith.constant 0.000000e+00 : f32
    %59 = vector.broadcast %cst_17 : f32 to vector<4x3xf32>
    %60 = arith.subf %59, %58 : vector<4x3xf32>
    %61 = math.exp %60 : vector<4x3xf32>
    %cst_18 = arith.constant 1.000000e+00 : f32
    %62 = vector.broadcast %cst_18 : f32 to vector<4x3xf32>
    %63 = arith.addf %62, %61 : vector<4x3xf32>
    %cst_19 = arith.constant 1.000000e+00 : f32
    %64 = vector.broadcast %cst_19 : f32 to vector<4x3xf32>
    %65 = arith.subf %63, %64 : vector<4x3xf32>
    %cst_20 = arith.constant 0.000000e+00 : f32
    %66 = vector.broadcast %cst_20 : f32 to vector<4x3xf32>
    %67 = arith.cmpf oeq, %65, %66 : vector<4x3xf32>
    %68 = math.log %63 : vector<4x3xf32>
    %69 = arith.divf %61, %65 : vector<4x3xf32>
    %70 = arith.mulf %68, %69 : vector<4x3xf32>
    %71 = arith.select %67, %61, %70 : vector<4x3xi1>, vector<4x3xf32>
    %72 = arith.addf %57, %71 : vector<4x3xf32>
    %c3_i32_21 = arith.constant 3 : i32
    %73 = vector.broadcast %c3_i32_21 : i32 to vector<4x3xi32>
    %74 = arith.cmpi eq, %4, %73 : vector<4x3xi32>
    %75 = arith.mulf %1, %3 : vector<4x3xf32>
    %76 = arith.subf %72, %75 : vector<4x3xf32>
    %cst_22 = arith.constant 0.000000e+00 : f32
    %77 = vector.broadcast %cst_22 : f32 to vector<4x3xf32>
    %78 = arith.select %74, %76, %77 : vector<4x3xi1>, vector<4x3xf32>
    %79 = vector.shape_cast %78 : vector<4x3xf32> to vector<1x4x3xf32>
    %cst_23 = arith.constant dense<0.000000e+00> : vector<1xf32>
    %80 = vector.multi_reduction <add>, %79, %cst_23 [1, 2] : vector<1x4x3xf32> to vector<1xf32>
    %81 = vector.shape_cast %80 : vector<1xf32> to vector<1x1x1xf32>
    %82 = vector.extract %81[0, 0, 0] : f32 from vector<1x1x1xf32>
    %cst_24 = arith.constant 3.000000e+00 : f32
    %83 = arith.divf %82, %cst_24 : f32
    %84 = math.log %30 : vector<4x3xf32>
    %cst_25 = arith.constant -1.000000e+02 : f32
    %85 = vector.broadcast %cst_25 : f32 to vector<4x3xf32>
    %86 = arith.maximumf %84, %85 : vector<4x3xf32>
    %cst_26 = arith.constant 1.000000e+00 : f32
    %87 = vector.broadcast %cst_26 : f32 to vector<4x3xf32>
    %88 = arith.subf %87, %30 : vector<4x3xf32>
    %89 = math.log %88 : vector<4x3xf32>
    %cst_27 = arith.constant -1.000000e+02 : f32
    %90 = vector.broadcast %cst_27 : f32 to vector<4x3xf32>
    %91 = arith.maximumf %89, %90 : vector<4x3xf32>
    %92 = arith.mulf %3, %86 : vector<4x3xf32>
    %cst_28 = arith.constant 1.000000e+00 : f32
    %93 = vector.broadcast %cst_28 : f32 to vector<4x3xf32>
    %94 = arith.subf %93, %3 : vector<4x3xf32>
    %95 = arith.mulf %94, %91 : vector<4x3xf32>
    %96 = arith.addf %92, %95 : vector<4x3xf32>
    %cst_29 = arith.constant 0.000000e+00 : f32
    %97 = vector.broadcast %cst_29 : f32 to vector<4x3xf32>
    %98 = arith.subf %97, %96 : vector<4x3xf32>
    %cst_30 = arith.constant 0.000000e+00 : f32
    %99 = vector.broadcast %cst_30 : f32 to vector<4x3xf32>
    %c2_i32 = arith.constant 2 : i32
    %100 = vector.broadcast %c2_i32 : i32 to vector<4x3xi32>
    %101 = arith.cmpi eq, %9, %100 : vector<4x3xi32>
    %cst_31 = arith.constant 0.0920245423 : f32
    %102 = vector.broadcast %cst_31 : f32 to vector<4x3xf32>
    %103 = arith.select %101, %102, %99 : vector<4x3xi1>, vector<4x3xf32>
    %c3_i32_32 = arith.constant 3 : i32
    %104 = vector.broadcast %c3_i32_32 : i32 to vector<4x3xi32>
    %105 = arith.cmpi eq, %9, %104 : vector<4x3xi32>
    %cst_33 = arith.constant 0.234662578 : f32
    %106 = vector.broadcast %cst_33 : f32 to vector<4x3xf32>
    %107 = arith.select %105, %106, %103 : vector<4x3xi1>, vector<4x3xf32>
    %c4_i32 = arith.constant 4 : i32
    %108 = vector.broadcast %c4_i32 : i32 to vector<4x3xi32>
    %109 = arith.cmpi eq, %9, %108 : vector<4x3xi32>
    %cst_34 = arith.constant 0.0782208592 : f32
    %110 = vector.broadcast %cst_34 : f32 to vector<4x3xf32>
    %111 = arith.select %109, %110, %107 : vector<4x3xi1>, vector<4x3xf32>
    %c6_i32 = arith.constant 6 : i32
    %112 = vector.broadcast %c6_i32 : i32 to vector<4x3xi32>
    %113 = arith.cmpi eq, %9, %112 : vector<4x3xi32>
    %cst_35 = arith.constant 0.104294479 : f32
    %114 = vector.broadcast %cst_35 : f32 to vector<4x3xf32>
    %115 = arith.select %113, %114, %111 : vector<4x3xi1>, vector<4x3xf32>
    %c7_i32 = arith.constant 7 : i32
    %116 = vector.broadcast %c7_i32 : i32 to vector<4x3xi32>
    %117 = arith.cmpi eq, %9, %116 : vector<4x3xi32>
    %cst_36 = arith.constant 0.104294479 : f32
    %118 = vector.broadcast %cst_36 : f32 to vector<4x3xf32>
    %119 = arith.select %117, %118, %115 : vector<4x3xi1>, vector<4x3xf32>
    %c9_i32 = arith.constant 9 : i32
    %120 = vector.broadcast %c9_i32 : i32 to vector<4x3xi32>
    %121 = arith.cmpi eq, %9, %120 : vector<4x3xi32>
    %cst_37 = arith.constant 0.0625766888 : f32
    %122 = vector.broadcast %cst_37 : f32 to vector<4x3xf32>
    %123 = arith.select %121, %122, %119 : vector<4x3xi1>, vector<4x3xf32>
    %c10_i32 = arith.constant 10 : i32
    %124 = vector.broadcast %c10_i32 : i32 to vector<4x3xi32>
    %125 = arith.cmpi eq, %9, %124 : vector<4x3xi32>
    %cst_38 = arith.constant 0.0625766888 : f32
    %126 = vector.broadcast %cst_38 : f32 to vector<4x3xf32>
    %127 = arith.select %125, %126, %123 : vector<4x3xi1>, vector<4x3xf32>
    %c11_i32 = arith.constant 11 : i32
    %128 = vector.broadcast %c11_i32 : i32 to vector<4x3xi32>
    %129 = arith.cmpi eq, %9, %128 : vector<4x3xi32>
    %cst_39 = arith.constant 0.187730059 : f32
    %130 = vector.broadcast %cst_39 : f32 to vector<4x3xf32>
    %131 = arith.select %129, %130, %127 : vector<4x3xi1>, vector<4x3xf32>
    %132 = arith.mulf %131, %98 : vector<4x3xf32>
    %133 = vector.shape_cast %132 : vector<4x3xf32> to vector<1x4x3xf32>
    %cst_40 = arith.constant dense<0.000000e+00> : vector<1xf32>
    %134 = vector.multi_reduction <add>, %133, %cst_40 [1, 2] : vector<1x4x3xf32> to vector<1xf32>
    %135 = vector.shape_cast %134 : vector<1xf32> to vector<1x1x1xf32>
    %136 = vector.extract %135[0, 0, 0] : f32 from vector<1x1x1xf32>
    %c1_i32 = arith.constant 1 : i32
    %137 = vector.broadcast %c1_i32 : i32 to vector<4x3xi32>
    %138 = arith.cmpi eq, %9, %137 : vector<4x3xi32>
    %c5_i32 = arith.constant 5 : i32
    %139 = vector.broadcast %c5_i32 : i32 to vector<4x3xi32>
    %140 = arith.cmpi eq, %9, %139 : vector<4x3xi32>
    %141 = arith.ori %138, %140 : vector<4x3xi1>
    %c8_i32 = arith.constant 8 : i32
    %142 = vector.broadcast %c8_i32 : i32 to vector<4x3xi32>
    %143 = arith.cmpi eq, %9, %142 : vector<4x3xi32>
    %144 = arith.ori %141, %143 : vector<4x3xi1>
    %145 = arith.extui %144 : vector<4x3xi1> to vector<4x3xi32>
    %146 = arith.sitofp %145 : vector<4x3xi32> to vector<4x3xf32>
    %147 = arith.mulf %146, %30 : vector<4x3xf32>
    %148 = vector.shape_cast %147 : vector<4x3xf32> to vector<1x4x3xf32>
    %cst_41 = arith.constant dense<0.000000e+00> : vector<1xf32>
    %149 = vector.multi_reduction <add>, %148, %cst_41 [1, 2] : vector<1x4x3xf32> to vector<1xf32>
    %150 = vector.shape_cast %149 : vector<1xf32> to vector<1x1x1xf32>
    %151 = vector.extract %150[0, 0, 0] : f32 from vector<1x1x1xf32>
    %cst_42 = arith.constant 3.000000e+00 : f32
    %152 = arith.divf %151, %cst_42 : f32
    %153 = arith.mulf %146, %3 : vector<4x3xf32>
    %154 = vector.shape_cast %153 : vector<4x3xf32> to vector<1x4x3xf32>
    %cst_43 = arith.constant dense<0.000000e+00> : vector<1xf32>
    %155 = vector.multi_reduction <add>, %154, %cst_43 [1, 2] : vector<1x4x3xf32> to vector<1xf32>
    %156 = vector.shape_cast %155 : vector<1xf32> to vector<1x1x1xf32>
    %157 = vector.extract %156[0, 0, 0] : f32 from vector<1x1x1xf32>
    %cst_44 = arith.constant 3.000000e+00 : f32
    %158 = arith.divf %157, %cst_44 : f32
    %159 = math.log %152 : f32
    %cst_45 = arith.constant -1.000000e+02 : f32
    %160 = arith.maximumf %159, %cst_45 : f32
    %161 = arith.mulf %158, %160 : f32
    %cst_46 = arith.constant 1.000000e+00 : f32
    %162 = arith.subf %cst_46, %158 : f32
    %cst_47 = arith.constant 1.000000e+00 : f32
    %163 = arith.subf %cst_47, %152 : f32
    %164 = math.log %163 : f32
    %cst_48 = arith.constant -1.000000e+02 : f32
    %165 = arith.maximumf %164, %cst_48 : f32
    %166 = arith.mulf %162, %165 : f32
    %167 = arith.addf %161, %166 : f32
    %cst_49 = arith.constant 0.000000e+00 : f32
    %168 = arith.subf %cst_49, %167 : f32
    %cst_50 = arith.constant 0.0736196339 : f32
    %169 = arith.mulf %cst_50, %168 : f32
    %170 = arith.addf %136, %169 : f32
    %c0_51 = arith.constant 0 : index
    %c0_52 = arith.constant 0 : index
    %c0_53 = arith.constant 0 : index
    %171 = vector.load %arg1[%c0_51, %c0_52, %c0_53] : memref<2x1x128xf32, #tpu.memory_space<vmem>>, vector<1x1x128xf32>
    %172 = vector.shape_cast %171 : vector<1x1x128xf32> to vector<1x128xf32>
    %c1_54 = arith.constant 1 : index
    %c0_55 = arith.constant 0 : index
    %c0_56 = arith.constant 0 : index
    %173 = vector.load %arg1[%c1_54, %c0_55, %c0_56] : memref<2x1x128xf32, #tpu.memory_space<vmem>>, vector<1x1x128xf32>
    %174 = vector.shape_cast %173 : vector<1x1x128xf32> to vector<1x128xf32>
    %175 = tpu.iota {dimensions = array<i32: 0>} : vector<1x128xi32>
    %c128_i32 = arith.constant 128 : i32
    %176 = vector.broadcast %c128_i32 : i32 to vector<1x128xi32>
    %177 = arith.muli %175, %176 : vector<1x128xi32>
    %178 = tpu.iota {dimensions = array<i32: 1>} : vector<1x128xi32>
    %179 = arith.addi %177, %178 : vector<1x128xi32>
    %c16_i32 = arith.constant 16 : i32
    %180 = vector.broadcast %c16_i32 : i32 to vector<1x128xi32>
    %181 = arith.cmpi slt, %179, %180 : vector<1x128xi32>
    %182 = arith.extui %181 : vector<1x128xi1> to vector<1x128xi32>
    %183 = arith.sitofp %182 : vector<1x128xi32> to vector<1x128xf32>
    %cst_57 = arith.constant 0.000000e+00 : f32
    %184 = vector.broadcast %cst_57 : f32 to vector<1x128xf32>
    %185 = arith.maximumf %172, %184 : vector<1x128xf32>
    %186 = math.absf %172 : vector<1x128xf32>
    %cst_58 = arith.constant 0.000000e+00 : f32
    %187 = vector.broadcast %cst_58 : f32 to vector<1x128xf32>
    %188 = arith.subf %187, %186 : vector<1x128xf32>
    %189 = math.exp %188 : vector<1x128xf32>
    %cst_59 = arith.constant 1.000000e+00 : f32
    %190 = vector.broadcast %cst_59 : f32 to vector<1x128xf32>
    %191 = arith.addf %190, %189 : vector<1x128xf32>
    %cst_60 = arith.constant 1.000000e+00 : f32
    %192 = vector.broadcast %cst_60 : f32 to vector<1x128xf32>
    %193 = arith.subf %191, %192 : vector<1x128xf32>
    %cst_61 = arith.constant 0.000000e+00 : f32
    %194 = vector.broadcast %cst_61 : f32 to vector<1x128xf32>
    %195 = arith.cmpf oeq, %193, %194 : vector<1x128xf32>
    %196 = math.log %191 : vector<1x128xf32>
    %197 = arith.divf %189, %193 : vector<1x128xf32>
    %198 = arith.mulf %196, %197 : vector<1x128xf32>
    %199 = arith.select %195, %189, %198 : vector<1x128xi1>, vector<1x128xf32>
    %200 = arith.addf %185, %199 : vector<1x128xf32>
    %201 = arith.subf %200, %172 : vector<1x128xf32>
    %202 = arith.mulf %172, %174 : vector<1x128xf32>
    %203 = arith.subf %200, %202 : vector<1x128xf32>
    %204 = arith.mulf %203, %183 : vector<1x128xf32>
    %205 = vector.shape_cast %204 : vector<1x128xf32> to vector<1x1x128xf32>
    %cst_62 = arith.constant dense<0.000000e+00> : vector<1xf32>
    %206 = vector.multi_reduction <add>, %205, %cst_62 [1, 2] : vector<1x1x128xf32> to vector<1xf32>
    %207 = vector.shape_cast %206 : vector<1xf32> to vector<1x1x1xf32>
    %208 = vector.extract %207[0, 0, 0] : f32 from vector<1x1x1xf32>
    %cst_63 = arith.constant 1.600000e+01 : f32
    %209 = arith.divf %208, %cst_63 : f32
    %cst_64 = arith.constant 1.000000e+02 : f32
    %210 = vector.broadcast %cst_64 : f32 to vector<1x128xf32>
    %211 = arith.minimumf %201, %210 : vector<1x128xf32>
    %212 = arith.mulf %174, %211 : vector<1x128xf32>
    %cst_65 = arith.constant 1.000000e+00 : f32
    %213 = vector.broadcast %cst_65 : f32 to vector<1x128xf32>
    %214 = arith.subf %213, %174 : vector<1x128xf32>
    %cst_66 = arith.constant 1.000000e+02 : f32
    %215 = vector.broadcast %cst_66 : f32 to vector<1x128xf32>
    %216 = arith.minimumf %200, %215 : vector<1x128xf32>
    %217 = arith.mulf %214, %216 : vector<1x128xf32>
    %218 = arith.addf %212, %217 : vector<1x128xf32>
    %219 = arith.mulf %174, %183 : vector<1x128xf32>
    %220 = vector.shape_cast %219 : vector<1x128xf32> to vector<1x1x128xf32>
    %cst_67 = arith.constant dense<0.000000e+00> : vector<1xf32>
    %221 = vector.multi_reduction <add>, %220, %cst_67 [1, 2] : vector<1x1x128xf32> to vector<1xf32>
    %222 = vector.shape_cast %221 : vector<1xf32> to vector<1x1x1xf32>
    %223 = vector.extract %222[0, 0, 0] : f32 from vector<1x1x1xf32>
    %cst_68 = arith.constant 1.600000e+01 : f32
    %224 = arith.divf %223, %cst_68 : f32
    %cst_69 = arith.constant 0.0736196265 : f32
    %225 = arith.mulf %cst_69, %224 : f32
    %226 = arith.mulf %218, %183 : vector<1x128xf32>
    %227 = vector.shape_cast %226 : vector<1x128xf32> to vector<1x1x128xf32>
    %cst_70 = arith.constant dense<0.000000e+00> : vector<1xf32>
    %228 = vector.multi_reduction <add>, %227, %cst_70 [1, 2] : vector<1x1x128xf32> to vector<1xf32>
    %229 = vector.shape_cast %228 : vector<1xf32> to vector<1x1x1xf32>
    %230 = vector.extract %229[0, 0, 0] : f32 from vector<1x1x1xf32>
    %231 = arith.mulf %225, %230 : f32
    %232 = arith.addf %209, %55 : f32
    %233 = arith.addf %232, %83 : f32
    %cst_71 = arith.constant 5.000000e+00 : f32
    %234 = arith.divf %233, %cst_71 : f32
    %cst_72 = arith.constant 0.0736196265 : f32
    %235 = arith.mulf %cst_72, %224 : f32
    %cst_73 = arith.constant 1.600000e+01 : f32
    %236 = arith.mulf %235, %cst_73 : f32
    %cst_74 = arith.constant 1.000000e+00 : f32
    %237 = arith.addf %cst_74, %236 : f32
    %238 = arith.addf %170, %231 : f32
    %239 = arith.divf %238, %237 : f32
    %c0_75 = arith.constant 0 : index
    %240 = memref.load %arg2[%c0_75] : memref<3xf32, #tpu.memory_space<smem>>
    memref.store %209, %arg2[%c0_75] : memref<3xf32, #tpu.memory_space<smem>>
    %c1_76 = arith.constant 1 : index
    %241 = memref.load %arg2[%c1_76] : memref<3xf32, #tpu.memory_space<smem>>
    memref.store %234, %arg2[%c1_76] : memref<3xf32, #tpu.memory_space<smem>>
    %c2 = arith.constant 2 : index
    %242 = memref.load %arg2[%c2] : memref<3xf32, #tpu.memory_space<smem>>
    memref.store %239, %arg2[%c2] : memref<3xf32, #tpu.memory_space<smem>>
    return
  }
}

</mosaic_0001>

<llo_original>
// kernel: combo_loss.1
$region0: #{combo_loss.1}
  #allocation0 [shape = 'u32[]', space=smem, size = 0x4, offset = 0x4, fixed_abs, tag = 'smem constant byte address 0x4 - core index']
  #allocation1 [shape = 'u32[144,128]{1,0:T(1,128)}', space=vmem, size = 0x12000, scoped, tag = 'internal scratch']
  %s0 = inlined_call_operand.vmem [shape: f32[2,4,3], index: 0, kind: input, shape index: {}]
  %s1 = inlined_call_operand.vmem [shape: f32[2,1,128], index: 1, kind: input, shape index: {}]
  %s2 = inlined_call_operand.hbm [shape: f32[3], index: 2, kind: output, shape index: {}]
  %s3 = sld [smem:[#allocation0]]
  $region18: #{combo_loss.1} parent=0
    _
  %s5 = ssub.s32 1, %s3
  %s6 = scalar_select 0, %s5, %s3
  $region1: #{combo_loss.1} parent=0
    #allocation2 [shape = 'u8[512]{0}', space=smem, size = 0x200, scoped, tag = 'output window, operand 0, single buffered']
    #allocation3 [shape = 's32[1]{0}', space=sflag, size = 0x4, scoped, tag = 'scoped memory for combo_loss.1']
    %7 = vsyncpa [#allocation3], 0
    // Predicated region
    $region2: #{combo_loss.1} parent=1 // pred_check
      _
    $region3: #{combo_loss.1} parent=1 // pred_check_branch
      %9 = sbr.rel (0) target = $region5
    $region4: #{combo_loss.1} parent=1 // pred_region
      _
    $region5: #{combo_loss.1} parent=1 // pred_fallthru
      _
    // Predicated region
    $region6: #{combo_loss.1} parent=1 // pred_check
      _
    $region7: #{combo_loss.1} parent=1 // pred_check_branch
      %11 = sbr.rel (0) target = $region9
    $region8: #{combo_loss.1} parent=1 // pred_region
      _
    $region9: #{combo_loss.1} parent=1 // pred_fallthru
      _
    %v12 = vld [vmem:[%s0] sm:$0xf]
    %s13 = scalar_lea.vmem %s0, 4
    %v14 = vld [vmem:[%s13] sm:$0xf]
    %v15 = vlaneseq
    %v16 = vshrl.u32 %v15, 7
    %v17 = vlaneseq
    %v18 = vand.u32 %v17, 127
    %v19 = vcvt.s32.f32 %v18
    %v20 = vmul.u32 %v16, 3
    %v21 = vadd.s32 %v20, %v18
    %vm22 = vcmask 19456
    %v23 = vsel %vm22, %v12, -inf
    %24 = vmax.xlane.f32.xlu0 %v23
    %v25 = vpop.xlane.xlu0 %24
    %v26 = vsub.f32 %v12, %v25
    %v27 = vmul.f32 %v26, 1.442695
    %v28 = vpow.pop %v27
    %v29 = vsel %vm22, %v28, 0.0
    %30 = vadd.xlane.f32.xlu0 %v29
    %v31 = vpop.xlane.xlu0 %30
    %v32 = vlog2.pop %v31
    %v33 = vmul.f32 %v32, 0.6931472
    %v34 = vadd.f32 %v25, %v33
    %v35 = vrcp.pop %v31
    %v36 = vmul.f32 %v28, %v35
    %v37 = vsub.f32 0.0, %v12
    %v38 = vmul.f32 %v37, 1.442695
    %v39 = vpow.pop %v38
    %v40 = vadd.f32 %v39, 1.0
    %v41 = vrcp.pop %v40
    %v42 = vmul.f32 1.0, %v41
    %vm43 = vcmp.lt.s32.totalorder %v16, 3
    %v44 = vsel %vm43, %v36, %v42
    %v45 = vsel %vm22, %v14, -inf
    %46 = vmax.xlane.f32.xlu0 %v45
    %v47 = vpop.xlane.xlu0 %46
    %vm48 = vcmp.ge.f32.partialorder %v14, %v47
    %v49 = vsel %vm48, %v19, 3.0
    %v50 = vsel %vm22, %v49, inf
    %51 = vmin.xlane.f32.xlu0 %v50
    %v52 = vpop.xlane.xlu0 %51
    %vm53 = vcmp.eq.f32.partialorder %v19, %v52
    %v54 = vsel %vm53, 1, 0
    %v55 = vcvt.s32.f32 %v54
    %v56 = vmul.f32 %v12, %v55
    %v57 = vsel %vm22, %v56, 0.0
    %58 = vadd.xlane.f32.xlu0 %v57
    %v59 = vpop.xlane.xlu0 %58
    %v60 = vsub.f32 %v34, %v59
    %v61 = vsel %vm43, %v60, 0.0
    %vm62 = vcmask 3072
    %v63 = vsel %vm62, %v61, 0.0
    %64 = vadd.xlane.f32.xlu0 %v63
    %v65 = vpop.xlane.xlu0 %64
    %v66 = vrot.slane %v65, 4
    %v67 = vadd.f32 %v65, %v66
    %v68 = vrot.slane %v67, 2
    %v69 = vadd.f32 %v67, %v68
    %v70 = vrot.slane %v69, 1
    %v71 = vadd.f32 %v69, %v70
    %s72 = vtos %v71
    %v73 = vmax.f32 %v12, 0.0
    %v74 = vand.u32 2147483647, %v12
    %v75 = vsub.f32 0.0, %v74
    %v76 = vmul.f32 %v75, 1.442695
    %v77 = vpow.pop %v76
    %v78 = vadd.f32 %v77, 1.0
    %v79 = vsub.f32 %v78, 1.0
    %vm80 = vcmp.eq.f32.partialorder %v79, 0.0
    %v81 = vlog2.pop %v78
    %v82 = vmul.f32 %v81, 0.6931472
    %v83 = vrcp.pop %v79
    %v84 = vmul.f32 %v77, %v83
    %v85 = vmul.f32 %v82, %v84
    %v86 = vsel %vm80, %v77, %v85
    %v87 = vadd.f32 %v73, %v86
    %vm88 = vcmp.eq.s32.totalorder %v16, 3
    %v89 = vmul.f32 %v12, %v14
    %v90 = vsub.f32 %v87, %v89
    %v91 = vsel %vm88, %v90, 0.0
    %v92 = vsel %vm22, %v91, 0.0
    %93 = vadd.xlane.f32.xlu0 %v92
    %v94 = vpop.xlane.xlu0 %93
    %v95 = vrot.slane %v94, 4
    %v96 = vadd.f32 %v94, %v95
    %v97 = vrot.slane %v96, 2
    %v98 = vadd.f32 %v96, %v97
    %v99 = vrot.slane %v98, 1
    %v100 = vadd.f32 %v98, %v99
    %s101 = vtos %v100
    %v102 = vrcp.pop 3.0
    %s103 = vtos %v102
    %s104 = smul.f32 %s101, %s103
    %v105 = vlog2.pop %v44
    %v106 = vmul.f32 %v105, 0.6931472
    %v107 = vmax.f32 %v106, -100.0
    %v108 = vsub.f32 1.0, %v44
    %v109 = vlog2.pop %v108
    %v110 = vmul.f32 %v109, 0.6931472
    %v111 = vmax.f32 %v110, -100.0
    %v112 = vmul.f32 %v14, %v107
    %v113 = vsub.f32 1.0, %v14
    %v114 = vmul.f32 %v113, %v111
    %v115 = vadd.f32 %v112, %v114
    %v116 = vsub.f32 0.0, %v115
    %vm117 = vcmp.eq.s32.totalorder %v21, 2
    %v118 = vsel %vm117, 0.09202454, 0.0
    %vm119 = vcmp.eq.s32.totalorder %v21, 3
    %v120 = vsel %vm119, 0.23466258, %v118
    %vm121 = vcmp.eq.s32.totalorder %v21, 4
    %v122 = vsel %vm121, 0.07822086, %v120
    %vm123 = vcmp.eq.s32.totalorder %v21, 6
    %v124 = vsel %vm123, 0.10429448, %v122
    %vm125 = vcmp.eq.s32.totalorder %v21, 7
    %v126 = vsel %vm125, 0.10429448, %v124
    %vm127 = vcmp.eq.s32.totalorder %v21, 9
    %v128 = vsel %vm127, 0.06257669, %v126
    %vm129 = vcmp.eq.s32.totalorder %v21, 10
    %v130 = vsel %vm129, 0.06257669, %v128
    %vm131 = vcmp.eq.s32.totalorder %v21, 11
    %v132 = vsel %vm131, 0.18773006, %v130
    %v133 = vmul.f32 %v132, %v116
    %v134 = vsel %vm22, %v133, 0.0
    %135 = vadd.xlane.f32.xlu0 %v134
    %v136 = vpop.xlane.xlu0 %135
    %v137 = vrot.slane %v136, 4
    %v138 = vadd.f32 %v136, %v137
    %v139 = vrot.slane %v138, 2
    %v140 = vadd.f32 %v138, %v139
    %v141 = vrot.slane %v140, 1
    %v142 = vadd.f32 %v140, %v141
    %s143 = vtos %v142
    %vm144 = vcmp.eq.s32.totalorder %v21, 1
    %vm145 = vcmp.eq.s32.totalorder %v21, 5
    %vm146 = vmor %vm144, %vm145
    %vm147 = vcmp.eq.s32.totalorder %v21, 8
    %vm148 = vmor %vm146, %vm147
    %v149 = vsel %vm148, 1, 0
    %v150 = vcvt.s32.f32 %v149
    %v151 = vmul.f32 %v150, %v44
    %v152 = vsel %vm22, %v151, 0.0
    %153 = vadd.xlane.f32.xlu0 %v152
    %v154 = vpop.xlane.xlu0 %153
    %v155 = vrot.slane %v154, 4
    %v156 = vadd.f32 %v154, %v155
    %v157 = vrot.slane %v156, 2
    %v158 = vadd.f32 %v156, %v157
    %v159 = vrot.slane %v158, 1
    %v160 = vadd.f32 %v158, %v159
    %s161 = vtos %v160
    %v162 = vrcp.pop 3.0
    %s163 = vtos %v162
    %s164 = smul.f32 %s161, %s163
    %v165 = vmul.f32 %v150, %v14
    %v166 = vsel %vm22, %v165, 0.0
    %167 = vadd.xlane.f32.xlu0 %v166
    %v168 = vpop.xlane.xlu0 %167
    %v169 = vrot.slane %v168, 4
    %v170 = vadd.f32 %v168, %v169
    %v171 = vrot.slane %v170, 2
    %v172 = vadd.f32 %v170, %v171
    %v173 = vrot.slane %v172, 1
    %v174 = vadd.f32 %v172, %v173
    %s175 = vtos %v174
    %v176 = vrcp.pop 3.0
    %s177 = vtos %v176
    %s178 = smul.f32 %s175, %s177
    %v179 = vstv %s164
    %v180 = vlog2.pop %v179
    %v181 = vmul.f32 %v180, 0.6931472
    %s182 = vtos %v181
    %s183 = smax.f32 %s182, -100.0
    %s184 = smul.f32 %s178, %s183
    %s185 = ssub.f32 1.0, %s178
    %s186 = ssub.f32 1.0, %s164
    %v187 = vstv %s186
    %v188 = vlog2.pop %v187
    %v189 = vmul.f32 %v188, 0.6931472
    %s190 = vtos %v189
    %s191 = smax.f32 %s190, -100.0
    %s192 = smul.f32 %s185, %s191
    %s193 = sadd.f32 %s184, %s192
    %s194 = ssub.f32 0.0, %s193
    %s195 = smul.f32 %s194, 0.073619634
    %s196 = sadd.f32 %s143, %s195
    %v197 = vld [vmem:[%s1] sm:$0x1]
    %s198 = scalar_lea.vmem %s1, 1
    %v199 = vld [vmem:[%s198] sm:$0x1]
    %v200 = vmul.u32 %v16, 128
    %v201 = vadd.s32 %v200, %v18
    %vm202 = vcmp.lt.s32.totalorder %v201, 16
    %v203 = vsel %vm202, 1, 0
    %v204 = vcvt.s32.f32 %v203
    %v205 = vmax.f32 %v197, 0.0
    %v206 = vand.u32 2147483647, %v197
    %v207 = vsub.f32 0.0, %v206
    %v208 = vmul.f32 %v207, 1.442695
    %v209 = vpow.pop %v208
    %v210 = vadd.f32 %v209, 1.0
    %v211 = vsub.f32 %v210, 1.0
    %vm212 = vcmp.eq.f32.partialorder %v211, 0.0
    %v213 = vlog2.pop %v210
    %v214 = vmul.f32 %v213, 0.6931472
    %v215 = vrcp.pop %v211
    %v216 = vmul.f32 %v209, %v215
    %v217 = vmul.f32 %v214, %v216
    %v218 = vsel %vm212, %v209, %v217
    %v219 = vadd.f32 %v205, %v218
    %v220 = vsub.f32 %v219, %v197
    %v221 = vmul.f32 %v197, %v199
    %v222 = vsub.f32 %v219, %v221
    %v223 = vmul.f32 %v222, %v204
    %vm224 = vcmask 1040384
    %v225 = vsel %vm224, %v223, 0.0
    %226 = vadd.xlane.f32.xlu0 %v225
    %v227 = vpop.xlane.xlu0 %226
    %v228 = vrot.slane %v227, 4
    %v229 = vadd.f32 %v227, %v228
    %v230 = vrot.slane %v229, 2
    %v231 = vadd.f32 %v229, %v230
    %v232 = vrot.slane %v231, 1
    %v233 = vadd.f32 %v231, %v232
    %s234 = vtos %v233
    %v235 = vrcp.pop 16.0
    %s236 = vtos %v235
    %s237 = smul.f32 %s234, %s236
    %v238 = vmin.f32 %v220, 100.0
    %v239 = vmul.f32 %v199, %v238
    %v240 = vsub.f32 1.0, %v199
    %v241 = vmin.f32 %v219, 100.0
    %v242 = vmul.f32 %v240, %v241
    %v243 = vadd.f32 %v239, %v242
    %v244 = vmul.f32 %v199, %v204
    %v245 = vsel %vm224, %v244, 0.0
    %246 = vadd.xlane.f32.xlu0 %v245
    %v247 = vpop.xlane.xlu0 %246
    %v248 = vrot.slane %v247, 4
    %v249 = vadd.f32 %v247, %v248
    %v250 = vrot.slane %v249, 2
    %v251 = vadd.f32 %v249, %v250
    %v252 = vrot.slane %v251, 1
    %v253 = vadd.f32 %v251, %v252
    %s254 = vtos %v253
    %v255 = vrcp.pop 16.0
    %s256 = vtos %v255
    %s257 = smul.f32 %s254, %s256
    %s258 = smul.f32 %s257, 0.07361963
    %v259 = vmul.f32 %v243, %v204
    %v260 = vsel %vm224, %v259, 0.0
    %261 = vadd.xlane.f32.xlu0 %v260
    %v262 = vpop.xlane.xlu0 %261
    %v263 = vrot.slane %v262, 4
    %v264 = vadd.f32 %v262, %v263
    %v265 = vrot.slane %v264, 2
    %v266 = vadd.f32 %v264, %v265
    %v267 = vrot.slane %v266, 1
    %v268 = vadd.f32 %v266, %v267
    %s269 = vtos %v268
    %s270 = smul.f32 %s258, %s269
    %s271 = sadd.f32 %s237, %s72
    %s272 = sadd.f32 %s271, %s104
    %v273 = vrcp.pop 5.0
    %s274 = vtos %v273
    %s275 = smul.f32 %s272, %s274
    %s276 = smul.f32 %s258, 16.0
    %s277 = sadd.f32 %s276, 1.0
    %s278 = sadd.f32 %s196, %s270
    %v279 = vstv %s277
    %v280 = vrcp.pop %v279
    %s281 = vtos %v280
    %s282 = smul.f32 %s278, %s281
    %s283 = scalar_lea.smem [#allocation2], 0
    %284 = sst [smem:[%s283]] %s237
    %s285 = scalar_lea.smem [#allocation2], 1
    %286 = sst [smem:[%s285]] %s275
    %s287 = scalar_lea.smem [#allocation2], 2
    %288 = sst [smem:[%s287]] %s282
    // Predicated region
    $region10: #{combo_loss.1} parent=1 // pred_check
      _
    $region11: #{combo_loss.1} parent=1 // pred_check_branch
      %290 = sbr.rel (0) target = $region13
    $region12: #{combo_loss.1} parent=1 // pred_region
      %s292 = ssub.s32 16, 16
      %293 = vsyncadd [#allocation3], %s292
      %296 = dma.smem_to_hbm [#allocation2], 16, %s2, [#allocation3]
    $region13: #{combo_loss.1} parent=1 // pred_fallthru
      _
    // Predicated region
    $region14: #{combo_loss.1} parent=1 // pred_check
      _
    $region15: #{combo_loss.1} parent=1 // pred_check_branch
      %298 = sbr.rel (0) target = $region17
    $region16: #{combo_loss.1} parent=1 // pred_region
      %299 = dma.done [#allocation3], 16
    $region17: #{combo_loss.1} parent=1 // pred_fallthru
      _
    %300 = sfence
    %301 = vsyncpa [#allocation3], 1

</llo_original>
